<compile_context>
chip_gen: v5e
topology: v5e:2x2
jax: 0.10.0
libtpu: 0.0.40
codegen_flags: <defaults>
</compile_context>

<pallas_src>
import jax
import jax.numpy as jnp
from jax.experimental import pallas as pl
from jax.experimental.pallas import tpu as pltpu

NOUT_FUSED = 7   # command_type(4) | param1(1) | param2(1) | size(1)
NOUT_PAD = 8     # narrow padded head width (column 7 stays zero / unused)


def _mlp_kernel(x_ref, w1_ref, b1_ref, w2_ref, b2_ref, w3_ref, b3_ref,
                wh_ref, bh_ref, out_ref):
    # encoder: Linear -> ReLU -> Linear -> ReLU -> Linear -> ReLU, all f32.
    h = jnp.dot(x_ref[...], w1_ref[...], preferred_element_type=jnp.float32)
    h = jnp.maximum(h + b1_ref[...], 0.0)
    h = jnp.dot(h, w2_ref[...], preferred_element_type=jnp.float32)
    h = jnp.maximum(h + b2_ref[...], 0.0)
    h = jnp.dot(h, w3_ref[...], preferred_element_type=jnp.float32)
    h = jnp.maximum(h + b3_ref[...], 0.0)
    # fused heads -> narrow (tb, 8) f32 store (16x less writeback than 128-wide)
    out_ref[...] = (jnp.dot(h, wh_ref[...], preferred_element_type=jnp.float32)
                    + bh_ref[...])


def init_params(key, input_size=5, hidden_size=64, output_size=4):
    """Deterministic synthetic parameters (shapes mirror AIModel.__init__)."""
    ks = jax.random.split(key, 14)

    def lin(kw, kb, fan_in, fan_out):
        # PyTorch-style uniform(-1/sqrt(fan_in), 1/sqrt(fan_in)); stored (in, out)
        bound = 1.0 / jnp.sqrt(jnp.float32(fan_in))
        w = jax.random.uniform(kw, (fan_in, fan_out), jnp.float32, -bound, bound)
        b = jax.random.uniform(kb, (1, fan_out), jnp.float32, -bound, bound)
        return w, b

    w1, b1 = lin(ks[0], ks[1], input_size, hidden_size)
    w2, b2 = lin(ks[2], ks[3], hidden_size, hidden_size * 2)
    w3, b3 = lin(ks[4], ks[5], hidden_size * 2, hidden_size)
    w_cmd, b_cmd = lin(ks[6], ks[7], hidden_size, output_size)   # 4
    w_p1, b_p1 = lin(ks[8], ks[9], hidden_size, 1)
    w_p2, b_p2 = lin(ks[10], ks[11], hidden_size, 1)
    w_sz, b_sz = lin(ks[12], ks[13], hidden_size, 1)

    # fuse heads -> (hidden, 7) / (1, 7), then zero-pad the last column to 8.
    wh = jnp.concatenate([w_cmd, w_p1, w_p2, w_sz], axis=1)
    bh = jnp.concatenate([b_cmd, b_p1, b_p2, b_sz], axis=1)
    wh = jnp.pad(wh, ((0, 0), (0, NOUT_PAD - wh.shape[1])))
    bh = jnp.pad(bh, ((0, 0), (0, NOUT_PAD - bh.shape[1])))

    # f32 weights everywhere: the kernel is DMA/overhead bound, so bf16 buys
    # nothing and f32 keeps parity with the float32 PyTorch module.
    return dict(w1=w1, b1=b1, w2=w2, b2=b2, w3=w3, b3=b3, wh=wh, bh=bh)


def _round_up(n, m):
    return ((n + m - 1) // m) * m


def _choose_tiling(B, block_b):
    """Pick (tile_rows, n_steps, padded_B).

    * tile rows are a multiple of 8 (sublane granularity)
    * >= 2 grid steps whenever the batch allows it, and an even step count
      for big batches, so the "parallel" axis splits evenly over v7x's 2 TCs
    * step count grows with the batch so a tile never exceeds ~block_b rows
      (x/out double buffers stay far inside v7x's 64 MiB VMEM)
    * tile size adapts to the batch -> tail padding is < 8 rows per step
      (no more 'round up to a fixed 512' waste)
    """
    B8 = _round_up(max(B, 1), 8)
    max_steps = B8 // 8                      # each step needs >= 8 rows
    n_steps = pl.cdiv(B8, block_b)
    if n_steps > 1 and n_steps % 2:
        n_steps += 1                          # even -> balanced megacore split
    n_steps = max(n_steps, 2)                 # try to feed both v7x TCs
    n_steps = min(n_steps, max_steps)
    n_steps = max(n_steps, 1)
    tb = _round_up(pl.cdiv(B8, n_steps), 8)
    n_steps = pl.cdiv(B8, tb)                 # re-derive after rounding tb
    return tb, n_steps, tb * n_steps


def ai_model_forward(x, params, block_b=2048):
    """Fused Pallas forward.  x: (B, input_size) float32.

    Returns (command_type (B,4), param1 (B,1), param2 (B,1), size (B,1))."""
    B, in_size = x.shape
    tb, n_steps, Bp = _choose_tiling(B, block_b)
    if Bp != B:
        x = jnp.pad(x, ((0, Bp - B), (0, 0)))   # small tail pad; sliced off below

    weight_args = (params["w1"], params["b1"], params["w2"], params["b2"],
                   params["w3"], params["b3"], params["wh"], params["bh"])
    # Weights/biases: full-extent blocks with a constant index_map -> DMA'd to
    # VMEM once and kept resident across all batch-grid iterations while the
    # x / out tiles stream through the double-buffered pipeline.
    resident = lambda a: pl.BlockSpec(a.shape, lambda i: (0, 0))

    out = pl.pallas_call(
        _mlp_kernel,
        out_shape=jax.ShapeDtypeStruct((Bp, NOUT_PAD), jnp.float32),
        grid=(n_steps,),
        in_specs=[pl.BlockSpec((tb, in_size), lambda i: (i, 0))]
                 + [resident(a) for a in weight_args],
        out_specs=pl.BlockSpec((tb, NOUT_PAD), lambda i: (i, 0)),
        compiler_params=pltpu.CompilerParams(
            dimension_semantics=("parallel",)),   # megacore split on v7x
    )(x, *weight_args)

    out = out[:B]
    # Split the narrow fused slab (28 useful of 32 bytes/row) back into the
    # four tensors AIModel.forward returns.
    return out[:, 0:4], out[:, 4:5], out[:, 5:6], out[:, 6:7]


def _reference_forward(x, params):
    """Plain-JAX f32 reference mirroring the kernel math."""
    h = jnp.maximum(jnp.dot(x, params["w1"]) + params["b1"], 0.0)
    h = jnp.maximum(jnp.dot(h, params["w2"]) + params["b2"], 0.0)
    h = jnp.maximum(jnp.dot(h, params["w3"]) + params["b3"], 0.0)
    out = jnp.dot(h, params["wh"]) + params["bh"]
    return out[:, 0:4], out[:, 4:5], out[:, 5:6], out[:, 6:7]


if __name__ == "__main__":
    key = jax.random.PRNGKey(0)
    k_param, k_x1, k_x2 = jax.random.split(key, 3)

    input_size, hidden_size, output_size = 5, 64, 4
    params = init_params(k_param, input_size, hidden_size, output_size)

    fwd = jax.jit(ai_model_forward)

    # case 1: small batch that still exercises a 2-step grid (two 32-row tiles)
    B1 = 64
    x1 = jax.random.normal(k_x1, (B1, input_size), jnp.float32)
    outs1 = fwd(x1, params)
    jax.block_until_ready(outs1)

    # case 2: tiny ragged batch (B=7) exercising the pad-to-tile tail path
    B2 = 7
    x2 = jax.random.normal(k_x2, (B2, input_size), jnp.float32)
    outs2 = fwd(x2, params)
    jax.block_until_ready(outs2)

    for x, outs, B in ((x1, outs1, B1), (x2, outs2, B2)):
        cmd, p1, p2, sz = outs
        assert cmd.shape == (B, 4) and p1.shape == (B, 1)
        assert p2.shape == (B, 1) and sz.shape == (B, 1)
        refs = _reference_forward(x, params)
        for got, ref in zip(outs, refs):
            err = float(jnp.max(jnp.abs(got - ref)))
            assert jnp.allclose(got, ref, atol=1e-2, rtol=1e-2), err

    print("KERNEL_OK")
</pallas_src>

<mosaic_0001>
module attributes {stable_mosaic.version = 11 : i64} {
  func.func @_mlp_kernel(%arg0: i32, %arg1: memref<32x5xf32, #tpu.memory_space<vmem>>, %arg2: memref<5x64xf32, #tpu.memory_space<vmem>>, %arg3: memref<1x64xf32, #tpu.memory_space<vmem>>, %arg4: memref<64x128xf32, #tpu.memory_space<vmem>>, %arg5: memref<1x128xf32, #tpu.memory_space<vmem>>, %arg6: memref<128x64xf32, #tpu.memory_space<vmem>>, %arg7: memref<1x64xf32, #tpu.memory_space<vmem>>, %arg8: memref<64x8xf32, #tpu.memory_space<vmem>>, %arg9: memref<1x8xf32, #tpu.memory_space<vmem>>, %arg10: memref<32x8xf32, #tpu.memory_space<vmem>>) attributes {dimension_semantics = [#tpu.dimension_semantics<parallel>], iteration_bounds = array<i64: 2>, scalar_prefetch = 0 : i64, scratch_operands = 0 : i64, tpu.core_type = #tpu.core_type<tc>, window_params = [{transform_indices = @transform_0, window_bounds = array<i64: 32, 5>}, {pipeline_mode = #tpu.pipeline_mode<synchronous>, transform_indices = @transform_1, window_bounds = array<i64: 5, 64>}, {pipeline_mode = #tpu.pipeline_mode<synchronous>, transform_indices = @transform_2, window_bounds = array<i64: 1, 64>}, {pipeline_mode = #tpu.pipeline_mode<synchronous>, transform_indices = @transform_3, window_bounds = array<i64: 64, 128>}, {pipeline_mode = #tpu.pipeline_mode<synchronous>, transform_indices = @transform_4, window_bounds = array<i64: 1, 128>}, {pipeline_mode = #tpu.pipeline_mode<synchronous>, transform_indices = @transform_5, window_bounds = array<i64: 128, 64>}, {pipeline_mode = #tpu.pipeline_mode<synchronous>, transform_indices = @transform_6, window_bounds = array<i64: 1, 64>}, {pipeline_mode = #tpu.pipeline_mode<synchronous>, transform_indices = @transform_7, window_bounds = array<i64: 64, 8>}, {pipeline_mode = #tpu.pipeline_mode<synchronous>, transform_indices = @transform_8, window_bounds = array<i64: 1, 8>}, {transform_indices = @transform_9, window_bounds = array<i64: 32, 8>}]} {
    %c0 = arith.constant 0 : index
    %c0_0 = arith.constant 0 : index
    %0 = vector.load %arg1[%c0, %c0_0] : memref<32x5xf32, #tpu.memory_space<vmem>>, vector<32x5xf32>
    %c0_1 = arith.constant 0 : index
    %c0_2 = arith.constant 0 : index
    %1 = vector.load %arg2[%c0_1, %c0_2] : memref<5x64xf32, #tpu.memory_space<vmem>>, vector<5x64xf32>
    %cst = arith.constant dense<0.000000e+00> : vector<32x64xf32>
    %2 = tpu.matmul %0, %1, %cst {dimension_numbers = #tpu.dot_dimension_numbers<[1], [0], [0], [1], [0, 0, 1, 1], [], []>} : vector<32x5xf32>, vector<5x64xf32>, vector<32x64xf32> -> vector<32x64xf32>
    %c0_3 = arith.constant 0 : index
    %c0_4 = arith.constant 0 : index
    %3 = vector.load %arg3[%c0_3, %c0_4] : memref<1x64xf32, #tpu.memory_space<vmem>>, vector<1x64xf32>
    %4 = vector.broadcast %3 : vector<1x64xf32> to vector<32x64xf32>
    %5 = arith.addf %2, %4 : vector<32x64xf32>
    %cst_5 = arith.constant 0.000000e+00 : f32
    %6 = vector.broadcast %cst_5 : f32 to vector<32x64xf32>
    %7 = arith.maximumf %5, %6 : vector<32x64xf32>
    %c0_6 = arith.constant 0 : index
    %c0_7 = arith.constant 0 : index
    %8 = vector.load %arg4[%c0_6, %c0_7] : memref<64x128xf32, #tpu.memory_space<vmem>>, vector<64x128xf32>
    %cst_8 = arith.constant dense<0.000000e+00> : vector<32x128xf32>
    %9 = tpu.matmul %7, %8, %cst_8 {dimension_numbers = #tpu.dot_dimension_numbers<[1], [0], [0], [1], [0, 0, 1, 1], [], []>} : vector<32x64xf32>, vector<64x128xf32>, vector<32x128xf32> -> vector<32x128xf32>
    %c0_9 = arith.constant 0 : index
    %c0_10 = arith.constant 0 : index
    %10 = vector.load %arg5[%c0_9, %c0_10] : memref<1x128xf32, #tpu.memory_space<vmem>>, vector<1x128xf32>
    %11 = vector.broadcast %10 : vector<1x128xf32> to vector<32x128xf32>
    %12 = arith.addf %9, %11 : vector<32x128xf32>
    %cst_11 = arith.constant 0.000000e+00 : f32
    %13 = vector.broadcast %cst_11 : f32 to vector<32x128xf32>
    %14 = arith.maximumf %12, %13 : vector<32x128xf32>
    %c0_12 = arith.constant 0 : index
    %c0_13 = arith.constant 0 : index
    %15 = vector.load %arg6[%c0_12, %c0_13] : memref<128x64xf32, #tpu.memory_space<vmem>>, vector<128x64xf32>
    %cst_14 = arith.constant dense<0.000000e+00> : vector<32x64xf32>
    %16 = tpu.matmul %14, %15, %cst_14 {dimension_numbers = #tpu.dot_dimension_numbers<[1], [0], [0], [1], [0, 0, 1, 1], [], []>} : vector<32x128xf32>, vector<128x64xf32>, vector<32x64xf32> -> vector<32x64xf32>
    %c0_15 = arith.constant 0 : index
    %c0_16 = arith.constant 0 : index
    %17 = vector.load %arg7[%c0_15, %c0_16] : memref<1x64xf32, #tpu.memory_space<vmem>>, vector<1x64xf32>
    %18 = vector.broadcast %17 : vector<1x64xf32> to vector<32x64xf32>
    %19 = arith.addf %16, %18 : vector<32x64xf32>
    %cst_17 = arith.constant 0.000000e+00 : f32
    %20 = vector.broadcast %cst_17 : f32 to vector<32x64xf32>
    %21 = arith.maximumf %19, %20 : vector<32x64xf32>
    %c0_18 = arith.constant 0 : index
    %c0_19 = arith.constant 0 : index
    %22 = vector.load %arg8[%c0_18, %c0_19] : memref<64x8xf32, #tpu.memory_space<vmem>>, vector<64x8xf32>
    %cst_20 = arith.constant dense<0.000000e+00> : vector<32x8xf32>
    %23 = tpu.matmul %21, %22, %cst_20 {dimension_numbers = #tpu.dot_dimension_numbers<[1], [0], [0], [1], [0, 0, 1, 1], [], []>} : vector<32x64xf32>, vector<64x8xf32>, vector<32x8xf32> -> vector<32x8xf32>
    %c0_21 = arith.constant 0 : index
    %c0_22 = arith.constant 0 : index
    %24 = vector.load %arg9[%c0_21, %c0_22] : memref<1x8xf32, #tpu.memory_space<vmem>>, vector<1x8xf32>
    %25 = vector.broadcast %24 : vector<1x8xf32> to vector<32x8xf32>
    %26 = arith.addf %23, %25 : vector<32x8xf32>
    %c0_23 = arith.constant 0 : index
    %c0_24 = arith.constant 0 : index
    %27 = vector.load %arg10[%c0_23, %c0_24] : memref<32x8xf32, #tpu.memory_space<vmem>>, vector<32x8xf32>
    tpu.vector_store %arg10[%c0_23, %c0_24], %26 {strides = array<i32>} : memref<32x8xf32, #tpu.memory_space<vmem>>, vector<32x8xf32>,
    return
  }
  func.func @transform_0(%arg0: i32) -> (i32, i32) {
    %c0_i32 = arith.constant 0 : i32
    %c0_i32_0 = arith.constant 0 : i32
    return %arg0, %c0_i32 : i32, i32
  }
  func.func @transform_1(%arg0: i32) -> (i32, i32) {
    %c0_i32 = arith.constant 0 : i32
    %c0_i32_0 = arith.constant 0 : i32
    %c0_i32_1 = arith.constant 0 : i32
    return %c0_i32, %c0_i32_0 : i32, i32
  }
  func.func @transform_2(%arg0: i32) -> (i32, i32) {
    %c0_i32 = arith.constant 0 : i32
    %c0_i32_0 = arith.constant 0 : i32
    %c0_i32_1 = arith.constant 0 : i32
    return %c0_i32, %c0_i32_0 : i32, i32
  }
  func.func @transform_3(%arg0: i32) -> (i32, i32) {
    %c0_i32 = arith.constant 0 : i32
    %c0_i32_0 = arith.constant 0 : i32
    %c0_i32_1 = arith.constant 0 : i32
    return %c0_i32, %c0_i32_0 : i32, i32
  }
  func.func @transform_4(%arg0: i32) -> (i32, i32) {
    %c0_i32 = arith.constant 0 : i32
    %c0_i32_0 = arith.constant 0 : i32
    %c0_i32_1 = arith.constant 0 : i32
    return %c0_i32, %c0_i32_0 : i32, i32
  }
  func.func @transform_5(%arg0: i32) -> (i32, i32) {
    %c0_i32 = arith.constant 0 : i32
    %c0_i32_0 = arith.constant 0 : i32
    %c0_i32_1 = arith.constant 0 : i32
    return %c0_i32, %c0_i32_0 : i32, i32
  }
  func.func @transform_6(%arg0: i32) -> (i32, i32) {
    %c0_i32 = arith.constant 0 : i32
    %c0_i32_0 = arith.constant 0 : i32
    %c0_i32_1 = arith.constant 0 : i32
    return %c0_i32, %c0_i32_0 : i32, i32
  }
  func.func @transform_7(%arg0: i32) -> (i32, i32) {
    %c0_i32 = arith.constant 0 : i32
    %c0_i32_0 = arith.constant 0 : i32
    %c0_i32_1 = arith.constant 0 : i32
    return %c0_i32, %c0_i32_0 : i32, i32
  }
  func.func @transform_8(%arg0: i32) -> (i32, i32) {
    %c0_i32 = arith.constant 0 : i32
    %c0_i32_0 = arith.constant 0 : i32
    %c0_i32_1 = arith.constant 0 : i32
    return %c0_i32, %c0_i32_0 : i32, i32
  }
  func.func @transform_9(%arg0: i32) -> (i32, i32) {
    %c0_i32 = arith.constant 0 : i32
    %c0_i32_0 = arith.constant 0 : i32
    return %arg0, %c0_i32 : i32, i32
  }
}

</mosaic_0001>

<llo_original>
// kernel: ai_model_forward.1
$region0: #{ai_model_forward.1}
  #allocation0 [shape = 'u32[]', space=smem, size = 0x4, offset = 0x4, fixed_abs, tag = 'smem constant byte address 0x4 - core index']
  #allocation1 [shape = 'u32[72,128]{1,0:T(1,128)}', space=vmem, size = 0x9000, scoped, tag = 'internal scratch']
  %s0 = inlined_call_operand.vmem [shape: f32[64,5], index: 0, kind: input, shape index: {}]
  %s1 = inlined_call_operand.vmem [shape: f32[5,64], index: 1, kind: input, shape index: {}]
  %s2 = inlined_call_operand.vmem [shape: f32[1,64], index: 2, kind: input, shape index: {}]
  %s3 = inlined_call_operand.vmem [shape: f32[64,128], index: 3, kind: input, shape index: {}]
  %s4 = inlined_call_operand.vmem [shape: f32[1,128], index: 4, kind: input, shape index: {}]
  %s5 = inlined_call_operand.vmem [shape: f32[128,64], index: 5, kind: input, shape index: {}]
  %s6 = inlined_call_operand.vmem [shape: f32[1,64], index: 6, kind: input, shape index: {}]
  %s7 = inlined_call_operand.vmem [shape: f32[64,8], index: 7, kind: input, shape index: {}]
  %s8 = inlined_call_operand.vmem [shape: f32[1,8], index: 8, kind: input, shape index: {}]
  %s9 = inlined_call_operand.vmem [shape: f32[64,8], index: 9, kind: output, shape index: {}]
  %s10 = sld [smem:[#allocation0]]
  $region69: #{ai_model_forward.1} parent=0
    _
  %s12 = ssub.s32 1, %s10
  %s13 = scalar_select 0, %s12, %s10
  loop: start=0, step=1, limit=4
  $region2: #{ai_model_forward.1} parent=0 // loop_pre_header
    _
  $region3: #{ai_model_forward.1} parent=0 // loop_header
    %s15 = sphi 0, %s19
    %p16 = scmp.ge.s32.totalorder %s15, 4
    %s25 = sphi 0, %s27
    %s28 = sphi 0, %s25
    %s29 = sphi 0, %s28
    %s45 = sphi 0, %s29
    %s49 = sphi 0, %s49
    %s51 = sphi 0, %s49
    %s52 = sphi 0, %s51
    %s66 = sphi 0, %s52
    %s70 = sphi 0, %s70
    %s72 = sphi 0, %s70
    %s73 = sphi 0, %s72
    %s87 = sphi 0, %s73
    %s91 = sphi 0, %s91
    %s93 = sphi 0, %s91
    %s94 = sphi 0, %s93
    %s108 = sphi 0, %s94
    %s112 = sphi 0, %s112
    %s114 = sphi 0, %s112
    %s115 = sphi 0, %s114
    %s129 = sphi 0, %s115
    %s133 = sphi 0, %s133
    %s135 = sphi 0, %s133
    %s136 = sphi 0, %s135
    %s150 = sphi 0, %s136
    %s154 = sphi 0, %s154
    %s156 = sphi 0, %s154
    %s157 = sphi 0, %s156
    %s171 = sphi 0, %s157
    %s175 = sphi 0, %s175
    %s177 = sphi 0, %s175
    %s178 = sphi 0, %s177
    %s192 = sphi 0, %s178
    %s196 = sphi 0, %s196
    %s198 = sphi 0, %s196
    %s199 = sphi 0, %s198
    %s213 = sphi 0, %s199
    %s219 = sphi 0, %s221
    %s222 = sphi 0, %s219
    %s223 = sphi 0, %s222
    %s239 = sphi 0, %s223
  $region4: #{ai_model_forward.1} parent=0 // loop_header_branch
    %18 = sbr.rel (%p16) target = $region8
  $region5: #{ai_model_forward.1} parent=0 // loop_body
    %s20 = ssub.s32 %s15, 1
    %s21 = ssub.s32 %s15, 2
    %s22 = sadd.s32 %s15, 1
    %s23 = ssub.s32 %s15, %s22
    %p24 = scmp.eq.s32.totalorder %s23, 0
    %s26 = sadd.s32 %s25, 1
    %s27 = scalar_select %p24, %s25, %s26
    %p30 = pneg %p24
    %p31 = scmp.eq.s32.totalorder %s15, 1
    %p32 = por %p30, %p31
    %p33 = scmp.ne.s32.totalorder %s25, %s28
    %p34 = scmp.eq.s32.totalorder %s15, 0
    %p35 = por %p33, %p34
    %p36 = scmp.ne.s32.totalorder %s25, %s28
    %p37 = scmp.eq.s32.totalorder %s20, 1
    %p38 = por %p36, %p37
    %p39 = scmp.ne.s32.totalorder %s28, %s29
    %p40 = scmp.eq.s32.totalorder %s20, 0
    %p41 = por %p39, %p40
    %p42 = scmp.ne.s32.totalorder %s28, %s29
    %p43 = scmp.eq.s32.totalorder %s21, 1
    %p44 = por %p42, %p43
    %p46 = scmp.ne.s32.totalorder %s29, %s45
    %p47 = scmp.eq.s32.totalorder %s21, 0
    %p48 = por %p46, %p47
    %s50 = sadd.s32 %s49, 1
    %p53 = scmp.eq.s32.totalorder %s15, 1
    %p54 = scmp.ne.s32.totalorder %s49, %s51
    %p55 = scmp.eq.s32.totalorder %s15, 0
    %p56 = por %p54, %p55
    %p57 = scmp.ne.s32.totalorder %s49, %s51
    %p58 = scmp.eq.s32.totalorder %s20, 1
    %p59 = por %p57, %p58
    %p60 = scmp.ne.s32.totalorder %s51, %s52
    %p61 = scmp.eq.s32.totalorder %s20, 0
    %p62 = por %p60, %p61
    %p63 = scmp.ne.s32.totalorder %s51, %s52
    %p64 = scmp.eq.s32.totalorder %s21, 1
    %p65 = por %p63, %p64
    %p67 = scmp.ne.s32.totalorder %s52, %s66
    %p68 = scmp.eq.s32.totalorder %s21, 0
    %p69 = por %p67, %p68
    %s71 = sadd.s32 %s70, 1
    %p74 = scmp.eq.s32.totalorder %s15, 1
    %p75 = scmp.ne.s32.totalorder %s70, %s72
    %p76 = scmp.eq.s32.totalorder %s15, 0
    %p77 = por %p75, %p76
    %p78 = scmp.ne.s32.totalorder %s70, %s72
    %p79 = scmp.eq.s32.totalorder %s20, 1
    %p80 = por %p78, %p79
    %p81 = scmp.ne.s32.totalorder %s72, %s73
    %p82 = scmp.eq.s32.totalorder %s20, 0
    %p83 = por %p81, %p82
    %p84 = scmp.ne.s32.totalorder %s72, %s73
    %p85 = scmp.eq.s32.totalorder %s21, 1
    %p86 = por %p84, %p85
    %p88 = scmp.ne.s32.totalorder %s73, %s87
    %p89 = scmp.eq.s32.totalorder %s21, 0
    %p90 = por %p88, %p89
    %s92 = sadd.s32 %s91, 1
    %p95 = scmp.eq.s32.totalorder %s15, 1
    %p96 = scmp.ne.s32.totalorder %s91, %s93
    %p97 = scmp.eq.s32.totalorder %s15, 0
    %p98 = por %p96, %p97
    %p99 = scmp.ne.s32.totalorder %s91, %s93
    %p100 = scmp.eq.s32.totalorder %s20, 1
    %p101 = por %p99, %p100
    %p102 = scmp.ne.s32.totalorder %s93, %s94
    %p103 = scmp.eq.s32.totalorder %s20, 0
    %p104 = por %p102, %p103
    %p105 = scmp.ne.s32.totalorder %s93, %s94
    %p106 = scmp.eq.s32.totalorder %s21, 1
    %p107 = por %p105, %p106
    %p109 = scmp.ne.s32.totalorder %s94, %s108
    %p110 = scmp.eq.s32.totalorder %s21, 0
    %p111 = por %p109, %p110
    %s113 = sadd.s32 %s112, 1
    %p116 = scmp.eq.s32.totalorder %s15, 1
    %p117 = scmp.ne.s32.totalorder %s112, %s114
    %p118 = scmp.eq.s32.totalorder %s15, 0
    %p119 = por %p117, %p118
    %p120 = scmp.ne.s32.totalorder %s112, %s114
    %p121 = scmp.eq.s32.totalorder %s20, 1
    %p122 = por %p120, %p121
    %p123 = scmp.ne.s32.totalorder %s114, %s115
    %p124 = scmp.eq.s32.totalorder %s20, 0
    %p125 = por %p123, %p124
    %p126 = scmp.ne.s32.totalorder %s114, %s115
    %p127 = scmp.eq.s32.totalorder %s21, 1
    %p128 = por %p126, %p127
    %p130 = scmp.ne.s32.totalorder %s115, %s129
    %p131 = scmp.eq.s32.totalorder %s21, 0
    %p132 = por %p130, %p131
    %s134 = sadd.s32 %s133, 1
    %p137 = scmp.eq.s32.totalorder %s15, 1
    %p138 = scmp.ne.s32.totalorder %s133, %s135
    %p139 = scmp.eq.s32.totalorder %s15, 0
    %p140 = por %p138, %p139
    %p141 = scmp.ne.s32.totalorder %s133, %s135
    %p142 = scmp.eq.s32.totalorder %s20, 1
    %p143 = por %p141, %p142
    %p144 = scmp.ne.s32.totalorder %s135, %s136
    %p145 = scmp.eq.s32.totalorder %s20, 0
    %p146 = por %p144, %p145
    %p147 = scmp.ne.s32.totalorder %s135, %s136
    %p148 = scmp.eq.s32.totalorder %s21, 1
    %p149 = por %p147, %p148
    %p151 = scmp.ne.s32.totalorder %s136, %s150
    %p152 = scmp.eq.s32.totalorder %s21, 0
    %p153 = por %p151, %p152
    %s155 = sadd.s32 %s154, 1
    %p158 = scmp.eq.s32.totalorder %s15, 1
    %p159 = scmp.ne.s32.totalorder %s154, %s156
    %p160 = scmp.eq.s32.totalorder %s15, 0
    %p161 = por %p159, %p160
    %p162 = scmp.ne.s32.totalorder %s154, %s156
    %p163 = scmp.eq.s32.totalorder %s20, 1
    %p164 = por %p162, %p163
    %p165 = scmp.ne.s32.totalorder %s156, %s157
    %p166 = scmp.eq.s32.totalorder %s20, 0
    %p167 = por %p165, %p166
    %p168 = scmp.ne.s32.totalorder %s156, %s157
    %p169 = scmp.eq.s32.totalorder %s21, 1
    %p170 = por %p168, %p169
    %p172 = scmp.ne.s32.totalorder %s157, %s171
    %p173 = scmp.eq.s32.totalorder %s21, 0
    %p174 = por %p172, %p173
    %s176 = sadd.s32 %s175, 1
    %p179 = scmp.eq.s32.totalorder %s15, 1
    %p180 = scmp.ne.s32.totalorder %s175, %s177
    %p181 = scmp.eq.s32.totalorder %s15, 0
    %p182 = por %p180, %p181
    %p183 = scmp.ne.s32.totalorder %s175, %s177
    %p184 = scmp.eq.s32.totalorder %s20, 1
    %p185 = por %p183, %p184
    %p186 = scmp.ne.s32.totalorder %s177, %s178
    %p187 = scmp.eq.s32.totalorder %s20, 0
    %p188 = por %p186, %p187
    %p189 = scmp.ne.s32.totalorder %s177, %s178
    %p190 = scmp.eq.s32.totalorder %s21, 1
    %p191 = por %p189, %p190
    %p193 = scmp.ne.s32.totalorder %s178, %s192
    %p194 = scmp.eq.s32.totalorder %s21, 0
    %p195 = por %p193, %p194
    %s197 = sadd.s32 %s196, 1
    %p200 = scmp.eq.s32.totalorder %s15, 1
    %p201 = scmp.ne.s32.totalorder %s196, %s198
    %p202 = scmp.eq.s32.totalorder %s15, 0
    %p203 = por %p201, %p202
    %p204 = scmp.ne.s32.totalorder %s196, %s198
    %p205 = scmp.eq.s32.totalorder %s20, 1
    %p206 = por %p204, %p205
    %p207 = scmp.ne.s32.totalorder %s198, %s199
    %p208 = scmp.eq.s32.totalorder %s20, 0
    %p209 = por %p207, %p208
    %p210 = scmp.ne.s32.totalorder %s198, %s199
    %p211 = scmp.eq.s32.totalorder %s21, 1
    %p212 = por %p210, %p211
    %p214 = scmp.ne.s32.totalorder %s199, %s213
    %p215 = scmp.eq.s32.totalorder %s21, 0
    %p216 = por %p214, %p215
    %s217 = ssub.s32 %s15, %s22
    %p218 = scmp.eq.s32.totalorder %s217, 0
    %s220 = sadd.s32 %s219, 1
    %s221 = scalar_select %p218, %s219, %s220
    %p224 = pneg %p218
    %p225 = scmp.eq.s32.totalorder %s15, 1
    %p226 = por %p224, %p225
    %p227 = scmp.ne.s32.totalorder %s219, %s222
    %p228 = scmp.eq.s32.totalorder %s15, 0
    %p229 = por %p227, %p228
    %p230 = scmp.ne.s32.totalorder %s219, %s222
    %p231 = scmp.eq.s32.totalorder %s20, 1
    %p232 = por %p230, %p231
    %p233 = scmp.ne.s32.totalorder %s222, %s223
    %p234 = scmp.eq.s32.totalorder %s20, 0
    %p235 = por %p233, %p234
    %p236 = scmp.ne.s32.totalorder %s222, %s223
    %p237 = scmp.eq.s32.totalorder %s21, 1
    %p238 = por %p236, %p237
    %p240 = scmp.ne.s32.totalorder %s223, %s239
    %p241 = scmp.eq.s32.totalorder %s21, 0
    %p242 = por %p240, %p241
    %p243 = scmp.le.s32.totalorder 1, %s15
    %p244 = scmp.lt.s32.totalorder %s15, 3
    %p245 = pnand %p243, %p244
    %p246 = pneg %p245
    // Predicated region
    $region9: #{ai_model_forward.1} parent=5 // pred_check
      _
    $region10: #{ai_model_forward.1} parent=5 // pred_check_branch
      %248 = sbr.rel (%p245) target = $region12
    $region11: #{ai_model_forward.1} parent=5 // pred_region
      %s249 = ssub.s32 %s15, 1
      // Predicated region
      $region13: #{ai_model_forward.1} parent=11 // pred_check
        %p250 = pneg %p62
      $region14: #{ai_model_forward.1} parent=11 // pred_check_branch
        %252 = sbr.rel (%p250) target = $region16
      $region15: #{ai_model_forward.1} parent=11 // pred_region
        _
      $region16: #{ai_model_forward.1} parent=11 // pred_fallthru
        _
      // Predicated region
      $region17: #{ai_model_forward.1} parent=11 // pred_check
        %p253 = pneg %p83
      $region18: #{ai_model_forward.1} parent=11 // pred_check_branch
        %255 = sbr.rel (%p253) target = $region20
      $region19: #{ai_model_forward.1} parent=11 // pred_region
        _
      $region20: #{ai_model_forward.1} parent=11 // pred_fallthru
        _
      // Predicated region
      $region21: #{ai_model_forward.1} parent=11 // pred_check
        %p256 = pneg %p104
      $region22: #{ai_model_forward.1} parent=11 // pred_check_branch
        %258 = sbr.rel (%p256) target = $region24
      $region23: #{ai_model_forward.1} parent=11 // pred_region
        _
      $region24: #{ai_model_forward.1} parent=11 // pred_fallthru
        _
      // Predicated region
      $region25: #{ai_model_forward.1} parent=11 // pred_check
        %p259 = pneg %p125
      $region26: #{ai_model_forward.1} parent=11 // pred_check_branch
        %261 = sbr.rel (%p259) target = $region28
      $region27: #{ai_model_forward.1} parent=11 // pred_region
        _
      $region28: #{ai_model_forward.1} parent=11 // pred_fallthru
        _
      // Predicated region
      $region29: #{ai_model_forward.1} parent=11 // pred_check
        %p262 = pneg %p146
      $region30: #{ai_model_forward.1} parent=11 // pred_check_branch
        %264 = sbr.rel (%p262) target = $region32
      $region31: #{ai_model_forward.1} parent=11 // pred_region
        _
      $region32: #{ai_model_forward.1} parent=11 // pred_fallthru
        _
      // Predicated region
      $region33: #{ai_model_forward.1} parent=11 // pred_check
        %p265 = pneg %p167
      $region34: #{ai_model_forward.1} parent=11 // pred_check_branch
        %267 = sbr.rel (%p265) target = $region36
      $region35: #{ai_model_forward.1} parent=11 // pred_region
        _
      $region36: #{ai_model_forward.1} parent=11 // pred_fallthru
        _
      // Predicated region
      $region37: #{ai_model_forward.1} parent=11 // pred_check
        %p268 = pneg %p188
      $region38: #{ai_model_forward.1} parent=11 // pred_check_branch
        %270 = sbr.rel (%p268) target = $region40
      $region39: #{ai_model_forward.1} parent=11 // pred_region
        _
      $region40: #{ai_model_forward.1} parent=11 // pred_fallthru
        _
      // Predicated region
      $region41: #{ai_model_forward.1} parent=11 // pred_check
        %p271 = pneg %p209
      $region42: #{ai_model_forward.1} parent=11 // pred_check_branch
        %273 = sbr.rel (%p271) target = $region44
      $region43: #{ai_model_forward.1} parent=11 // pred_region
        _
      $region44: #{ai_model_forward.1} parent=11 // pred_fallthru
        _
    $region12: #{ai_model_forward.1} parent=5 // pred_fallthru
      _
    %p274 = scmp.lt.s32.totalorder %s15, 2
    // Predicated region
    $region45: #{ai_model_forward.1} parent=5 // pred_check
      %p275 = pneg %p274
    $region46: #{ai_model_forward.1} parent=5 // pred_check_branch
      %277 = sbr.rel (%p275) target = $region48
    $region47: #{ai_model_forward.1} parent=5 // pred_region
      // Predicated region
      $region49: #{ai_model_forward.1} parent=47 // pred_check
        %p278 = pneg %p35
      $region50: #{ai_model_forward.1} parent=47 // pred_check_branch
        %280 = sbr.rel (%p278) target = $region52
      $region51: #{ai_model_forward.1} parent=47 // pred_region
        %s281 = smul.u32 4, %s15
        %p282 = scmp.lt.s32.totalorder %s281, 7
        %s283 = scalar_select %p282, %s281, 7
        %s284 = smul.addr %s283, 8
        %s285 = scalar_lea.vmem %s0, %s284
        %s286 = smul.u32 4, %s15
      $region52: #{ai_model_forward.1} parent=47 // pred_fallthru
        _
    $region48: #{ai_model_forward.1} parent=5 // pred_fallthru
      _
    %p287 = scmp.le.s32.totalorder 1, %s15
    %p288 = scmp.lt.s32.totalorder %s15, 3
    %p289 = pnand %p287, %p288
    %p290 = pneg %p289
    // Predicated region
    $region53: #{ai_model_forward.1} parent=5 // pred_check
      _
    $region54: #{ai_model_forward.1} parent=5 // pred_check_branch
      %292 = sbr.rel (%p289) target = $region56
    $region55: #{ai_model_forward.1} parent=5 // pred_region
      %s293 = ssub.s32 %s15, 1
      %s294 = smul.u32 4, %s20
      %p295 = scmp.lt.s32.totalorder %s294, 7
      %s296 = scalar_select %p295, %s294, 7
      %s297 = smul.addr %s296, 8
      %s298 = scalar_lea.vmem %s0, %s297
      %p299 = pneg %p41
      %p300 = pneg %p38
      %p301 = pneg %p62
      %p302 = pneg %p59
      %p303 = pneg %p83
      %p304 = pneg %p80
      %p305 = pneg %p104
      %p306 = pneg %p101
      %p307 = pneg %p125
      %p308 = pneg %p122
      %p309 = pneg %p146
      %p310 = pneg %p143
      %p311 = pneg %p167
      %p312 = pneg %p164
      %p313 = pneg %p188
      %p314 = pneg %p185
      %p315 = pneg %p209
      %p316 = pneg %p206
      %p317 = pneg %p235
      %p318 = pneg %p232
      %s319 = smul.u32 4, %s20
      %p320 = scmp.lt.s32.totalorder %s319, 7
      %s321 = scalar_select %p320, %s319, 7
      %s322 = smul.addr %s321, 8
      %s323 = scalar_lea.vmem %s9, %s322
      %s324 = smul.u32 4, %s20
      %p325 = scmp.lt.s32.totalorder %s324, 7
      %s326 = scalar_select %p325, %s324, 7
      %s327 = smul.addr %s326, 8
      %s328 = scalar_lea.vmem %s0, %s327
      %s329 = smul.u32 4, %s20
      %s330 = smul.u32 4, %s20
      %p331 = scmp.lt.s32.totalorder %s330, 7
      %s332 = scalar_select %p331, %s330, 7
      %s333 = smul.addr %s332, 8
      %s334 = scalar_lea.vmem %s9, %s333
      %s335 = smul.u32 4, %s20
      %v336 = vld [vmem:[%s328] sm:$0xff]
      %v337 = vld [vmem:[%s328 + $0x8] sm:$0xff]
      %v338 = vld [vmem:[%s328 + $0x10] sm:$0xff]
      %v339 = vld [vmem:[%s328 + $0x18] sm:$0xff]
      %v340 = vld [vmem:[%s1] sm:$0x1f]
      %v341 = vld [vmem:[%s2] sm:$0x1]
      %v343 = vperm.slane %v341, 0
      %vm345 = vcmask 39936
      %v347 = vsel %vm345, %v336, 0
      %v350 = vsel %vm345, %v337, 0
      %v353 = vsel %vm345, %v338, 0
      %v356 = vsel %vm345, %v339, 0
      %vm358 = vcmask 1044480
      %v360 = vsel %vm358, %v340, 0
      %362 = vmatpush.msra.mxu0 0.0
      %363 = vmatpush.msra.mxu0 0.0
      %364 = vmatpush.msra.mxu0 0.0
      %365 = vmatpush.msra.mxu0 0.0
      %366 = vmatpush.msra.mxu0 0.0
      %367 = vmatpush.msra.mxu0 0.0
      %368 = vmatpush.msra.mxu0 0.0
      %369 = vmatpush.msra.mxu0 0.0
      %370 = vmatpush.msra.mxu0 0.0
      %371 = vmatpush.msra.mxu0 0.0
      %372 = vmatpush.msra.mxu0 0.0
      %373 = vmatpush.msra.mxu0 0.0
      %374 = vmatpush.msra.mxu0 0.0
      %375 = vmatpush.msra.mxu0 0.0
      %376 = vmatpush.msra.mxu0 0.0
      %377 = vmatpush.msra.mxu0 %v360
      %378 = vmatmul.f32.gmra.mxu0 %v347
      %v379 = vpop.f32.mrf.mxu0
      %v380 = vadd.f32 %v343, %v379
      %381 = vmatmul.f32.gmra.mxu0 %v350
      %v382 = vpop.f32.mrf.mxu0
      %v383 = vadd.f32 %v343, %v382
      %384 = vmatmul.f32.gmra.mxu0 %v353
      %v385 = vpop.f32.mrf.mxu0
      %v386 = vadd.f32 %v343, %v385
      %387 = vmatmul.f32.gmra.mxu0 %v356
      %v388 = vpop.f32.mrf.mxu0
      %v389 = vadd.f32 %v343, %v388
      %390 = vdwg.mxu0
      %v391 = vmax.f32 %v380, 0.0
      %v392 = vmax.f32 %v383, 0.0
      %v393 = vmax.f32 %v386, 0.0
      %v394 = vmax.f32 %v389, 0.0
      %v395 = vld [vmem:[%s3] sm:$0xff]
      %v396 = vld [vmem:[%s3 + $0x8] sm:$0xff]
      %v397 = vld [vmem:[%s3 + $0x10] sm:$0xff]
      %v398 = vld [vmem:[%s3 + $0x18] sm:$0xff]
      %v399 = vld [vmem:[%s3 + $0x20] sm:$0xff]
      %v400 = vld [vmem:[%s3 + $0x28] sm:$0xff]
      %v401 = vld [vmem:[%s3 + $0x30] sm:$0xff]
      %v402 = vld [vmem:[%s3 + $0x38] sm:$0xff]
      %v403 = vld [vmem:[%s4] sm:$0x1]
      %v405 = vperm.slane %v403, 0
      %vm407 = vcmask 523264
      %v409 = vsel %vm407, %v391, 0
      %v412 = vsel %vm407, %v392, 0
      %v415 = vsel %vm407, %v393, 0
      %v418 = vsel %vm407, %v394, 0
      %420 = vmatpush.msra.mxu0 0.0
      %421 = vmatpush.msra.mxu0 0.0
      %422 = vmatpush.msra.mxu0 0.0
      %423 = vmatpush.msra.mxu0 0.0
      %424 = vmatpush.msra.mxu0 0.0
      %425 = vmatpush.msra.mxu0 0.0
      %426 = vmatpush.msra.mxu0 0.0
      %427 = vmatpush.msra.mxu0 0.0
      %428 = vmatpush.msra.mxu0 %v402
      %429 = vmatpush.msra.mxu0 %v401
      %430 = vmatpush.msra.mxu0 %v400
      %431 = vmatpush.msra.mxu0 %v399
      %432 = vmatpush.msra.mxu0 %v398
      %433 = vmatpush.msra.mxu0 %v397
      %434 = vmatpush.msra.mxu0 %v396
      %435 = vmatpush.msra.mxu0 %v395
      %436 = vmatmul.f32.gmra.mxu0 %v409
      %v437 = vpop.f32.mrf.mxu0
      %v438 = vadd.f32 %v405, %v437
      %439 = vmatmul.f32.gmra.mxu0 %v412
      %v440 = vpop.f32.mrf.mxu0
      %v441 = vadd.f32 %v405, %v440
      %442 = vmatmul.f32.gmra.mxu0 %v415
      %v443 = vpop.f32.mrf.mxu0
      %v444 = vadd.f32 %v405, %v443
      %445 = vmatmul.f32.gmra.mxu0 %v418
      %v446 = vpop.f32.mrf.mxu0
      %v447 = vadd.f32 %v405, %v446
      %448 = vdwg.mxu0
      %v449 = vmax.f32 %v438, 0.0
      %v450 = vmax.f32 %v441, 0.0
      %v451 = vmax.f32 %v444, 0.0
      %v452 = vmax.f32 %v447, 0.0
      %v453 = vld [vmem:[%s5] sm:$0xff]
      %v454 = vld [vmem:[%s5 + $0x8] sm:$0xff]
      %v455 = vld [vmem:[%s5 + $0x10] sm:$0xff]
      %v456 = vld [vmem:[%s5 + $0x18] sm:$0xff]
      %v457 = vld [vmem:[%s5 + $0x20] sm:$0xff]
      %v458 = vld [vmem:[%s5 + $0x28] sm:$0xff]
      %v459 = vld [vmem:[%s5 + $0x30] sm:$0xff]
      %v460 = vld [vmem:[%s5 + $0x38] sm:$0xff]
      %v461 = vld [vmem:[%s5 + $0x40] sm:$0xff]
      %v462 = vld [vmem:[%s5 + $0x48] sm:$0xff]
      %v463 = vld [vmem:[%s5 + $0x50] sm:$0xff]
      %v464 = vld [vmem:[%s5 + $0x58] sm:$0xff]
      %v465 = vld [vmem:[%s5 + $0x60] sm:$0xff]
      %v466 = vld [vmem:[%s5 + $0x68] sm:$0xff]
      %v467 = vld [vmem:[%s5 + $0x70] sm:$0xff]
      %v468 = vld [vmem:[%s5 + $0x78] sm:$0xff]
      %v469 = vld [vmem:[%s6] sm:$0x1]
      %v471 = vperm.slane %v469, 0
      %473 = vmatpush.msra.mxu0 %v468
      %474 = vmatpush.msra.mxu0 %v467
      %475 = vmatpush.msra.mxu0 %v466
      %476 = vmatpush.msra.mxu0 %v465
      %477 = vmatpush.msra.mxu0 %v464
      %478 = vmatpush.msra.mxu0 %v463
      %479 = vmatpush.msra.mxu0 %v462
      %480 = vmatpush.msra.mxu0 %v461
      %481 = vmatpush.msra.mxu0 %v460
      %482 = vmatpush.msra.mxu0 %v459
      %483 = vmatpush.msra.mxu0 %v458
      %484 = vmatpush.msra.mxu0 %v457
      %485 = vmatpush.msra.mxu0 %v456
      %486 = vmatpush.msra.mxu0 %v455
      %487 = vmatpush.msra.mxu0 %v454
      %488 = vmatpush.msra.mxu0 %v453
      %489 = vmatmul.f32.gmra.mxu0 %v449
      %v490 = vpop.f32.mrf.mxu0
      %v491 = vadd.f32 %v471, %v490
      %492 = vmatmul.f32.gmra.mxu0 %v450
      %v493 = vpop.f32.mrf.mxu0
      %v494 = vadd.f32 %v471, %v493
      %495 = vmatmul.f32.gmra.mxu0 %v451
      %v496 = vpop.f32.mrf.mxu0
      %v497 = vadd.f32 %v471, %v496
      %498 = vmatmul.f32.gmra.mxu0 %v452
      %v499 = vpop.f32.mrf.mxu0
      %v500 = vadd.f32 %v471, %v499
      %501 = vdwg.mxu0
      %v502 = vmax.f32 %v491, 0.0
      %v503 = vmax.f32 %v494, 0.0
      %v504 = vmax.f32 %v497, 0.0
      %v505 = vmax.f32 %v500, 0.0
      %v506 = vld [vmem:[%s7] sm:$0xff]
      %v507 = vld [vmem:[%s7 + $0x8] sm:$0xff]
      %v508 = vld [vmem:[%s7 + $0x10] sm:$0xff]
      %v509 = vld [vmem:[%s7 + $0x18] sm:$0xff]
      %v510 = vld [vmem:[%s7 + $0x20] sm:$0xff]
      %v511 = vld [vmem:[%s7 + $0x28] sm:$0xff]
      %v512 = vld [vmem:[%s7 + $0x30] sm:$0xff]
      %v513 = vld [vmem:[%s7 + $0x38] sm:$0xff]
      %v514 = vld [vmem:[%s8] sm:$0x1]
      %v516 = vperm.slane %v514, 0
      %v519 = vsel %vm407, %v502, 0
      %v522 = vsel %vm407, %v503, 0
      %v525 = vsel %vm407, %v504, 0
      %v528 = vsel %vm407, %v505, 0
      %530 = vmatpush.msra.mxu0 0.0
      %531 = vmatpush.msra.mxu0 0.0
      %532 = vmatpush.msra.mxu0 0.0
      %533 = vmatpush.msra.mxu0 0.0
      %534 = vmatpush.msra.mxu0 0.0
      %535 = vmatpush.msra.mxu0 0.0
      %536 = vmatpush.msra.mxu0 0.0
      %537 = vmatpush.msra.mxu0 0.0
      %538 = vmatpush.msra.mxu0 %v513
      %539 = vmatpush.msra.mxu0 %v512
      %540 = vmatpush.msra.mxu0 %v511
      %541 = vmatpush.msra.mxu0 %v510
      %542 = vmatpush.msra.mxu0 %v509
      %543 = vmatpush.msra.mxu0 %v508
      %544 = vmatpush.msra.mxu0 %v507
      %545 = vmatpush.msra.mxu0 %v506
      %546 = vmatmul.f32.gmra.mxu0 %v519
      %v547 = vpop.f32.mrf.mxu0
      %v548 = vadd.f32 %v516, %v547
      %549 = vmatmul.f32.gmra.mxu0 %v522
      %v550 = vpop.f32.mrf.mxu0
      %v551 = vadd.f32 %v516, %v550
      %552 = vmatmul.f32.gmra.mxu0 %v525
      %v553 = vpop.f32.mrf.mxu0
      %v554 = vadd.f32 %v516, %v553
      %555 = vmatmul.f32.gmra.mxu0 %v528
      %v556 = vpop.f32.mrf.mxu0
      %v557 = vadd.f32 %v516, %v556
      %558 = vdwg.mxu0
      %vm559 = vcmask 64512
      %560 = vst.msk [vmem:[%s334] sm:$0xff] %vm559, %v548
      %561 = vst.msk [vmem:[%s334 + $0x8] sm:$0xff] %vm559, %v551
      %562 = vst.msk [vmem:[%s334 + $0x10] sm:$0xff] %vm559, %v554
      %563 = vst.msk [vmem:[%s334 + $0x18] sm:$0xff] %vm559, %v557
      %s564 = smul.u32 4, %s20
      %p565 = scmp.lt.s32.totalorder %s564, 7
      %s566 = scalar_select %p565, %s564, 7
      %s567 = smul.addr %s566, 8
      %s568 = scalar_lea.vmem %s9, %s567
      // Predicated region
      $region57: #{ai_model_forward.1} parent=55 // pred_check
        %p569 = pneg %p232
      $region58: #{ai_model_forward.1} parent=55 // pred_check_branch
        %571 = sbr.rel (%p569) target = $region60
      $region59: #{ai_model_forward.1} parent=55 // pred_region
        %s572 = smul.u32 4, %s20
      $region60: #{ai_model_forward.1} parent=55 // pred_fallthru
        _
    $region56: #{ai_model_forward.1} parent=5 // pred_fallthru
      _
    %p573 = scmp.le.s32.totalorder 2, %s15
    // Predicated region
    $region61: #{ai_model_forward.1} parent=5 // pred_check
      %p574 = pneg %p573
    $region62: #{ai_model_forward.1} parent=5 // pred_check_branch
      %576 = sbr.rel (%p574) target = $region64
    $region63: #{ai_model_forward.1} parent=5 // pred_region
      %s577 = ssub.s32 %s15, 2
      // Predicated region
      $region65: #{ai_model_forward.1} parent=63 // pred_check
        %p578 = pneg %p238
      $region66: #{ai_model_forward.1} parent=63 // pred_check_branch
        %580 = sbr.rel (%p578) target = $region68
      $region67: #{ai_model_forward.1} parent=63 // pred_region
        %s581 = smul.u32 4, %s21
        %p582 = scmp.lt.s32.totalorder %s581, 7
        %s583 = scalar_select %p582, %s581, 7
        %s584 = smul.addr %s583, 8
        %s585 = scalar_lea.vmem %s9, %s584
      $region68: #{ai_model_forward.1} parent=63 // pred_fallthru
        _
    $region64: #{ai_model_forward.1} parent=5 // pred_fallthru
      _
  $region6: #{ai_model_forward.1} parent=0 // loop_footer
    %s19 = sadd.s32 1, %s15
  $region7: #{ai_model_forward.1} parent=0 // loop_footer_branch
    %14 = sbr.rel target = $region3
  $region8: #{ai_model_forward.1} parent=0 // loop_exit
    _

</llo_original>
